<compile_context>
chip_gen: v7x
topology: tpu7x:2x2x1
jax: 0.10.0
libtpu: 0.0.40
codegen_flags: <defaults>
</compile_context>

<pallas_src>
import functools

import jax
import jax.numpy as jnp
from jax.experimental import pallas as pl
from jax.experimental.pallas import tpu as pltpu


def _round_up(n, m):
    return ((n + m - 1) // m) * m


def pack_params(w1, b1, w2, b2):
    """Pack [W1^T | b1] and [W2^T | b2] into one f32 array (call ONCE, not per forward).

    w1: (state_dim, hidden), b1: (1, hidden) or (hidden,),
    w2: (hidden, out_dim),  b2: (1, out_dim) or (out_dim,).
    Layout (rows x cols), cols = max(state_dim, hidden) + 1:
      rows [0:hidden)              cols [0:state_dim) = W1^T ; col state_dim = b1
      rows [w2_row:w2_row+out_dim) cols [0:hidden)    = W2^T ; col hidden    = b2
    with w2_row = round_up(hidden, 8) so the W2 section starts sublane-aligned.
    """
    state_dim, hidden = w1.shape
    out_dim = w2.shape[1]
    w2_row = _round_up(hidden, 8)
    rows = _round_up(w2_row + out_dim, 8)
    cols = max(state_dim, hidden) + 1
    p = jnp.zeros((rows, cols), jnp.float32)
    p = p.at[:hidden, :state_dim].set(w1.T.astype(jnp.float32))
    p = p.at[:hidden, state_dim].set(b1.reshape(hidden).astype(jnp.float32))
    p = p.at[w2_row:w2_row + out_dim, :hidden].set(w2.T.astype(jnp.float32))
    p = p.at[w2_row:w2_row + out_dim, hidden].set(b2.reshape(out_dim).astype(jnp.float32))
    return p


def dqn_kernel(xt_ref, p_ref, ot_ref, *, state_dim, hidden, out_dim, w2_row):
    xt = xt_ref[...]                                        # (state_dim, tb)  f32
    p = p_ref[...]                                          # packed params (resident)

    w1t = p[:hidden, :state_dim]                            # (hidden, state_dim)
    b1 = p[:hidden, state_dim:state_dim + 1]                # (hidden, 1)
    w2t = p[w2_row:w2_row + out_dim, :hidden]               # (out_dim, hidden)
    b2 = p[w2_row:w2_row + out_dim, hidden:hidden + 1]      # (out_dim, 1)

    # Layer 1: h^T = relu(W1^T @ x^T + b1)   -- MXU, N = tb (lane-dense)
    ht = jnp.maximum(
        jnp.dot(w1t, xt, preferred_element_type=jnp.float32) + b1, 0.0)
    # Layer 2: out^T = W2^T @ h^T + b2       -- MXU, N = tb (lane-dense output)
    ot = jnp.dot(w2t, ht, preferred_element_type=jnp.float32) + b2
    ot_ref[...] = ot.astype(ot_ref.dtype)


@functools.partial(jax.jit, static_argnames=("hidden", "out_dim", "block_b"))
def dqn_forward(x, params, *, hidden, out_dim, block_b=2048):
    """x: (B, state_dim) float32; params: output of pack_params(). Returns (B, out_dim)."""
    B, state_dim = x.shape
    rows, cols = params.shape
    w2_row = _round_up(hidden, 8)

    # Batch lives on the lane axis -> tile must be a multiple of 128.
    # When B > 128, size the tile so there are >= 2 grid steps (v7x megacore).
    half = _round_up(-(-B // 2), 128)
    tb = max(128, min(block_b, half))
    b_pad = _round_up(B, tb)

    xt = x.T                                                # (state_dim, B) feature-major
    if b_pad != B:
        xt = jnp.pad(xt, ((0, 0), (0, b_pad - B)))          # padded lanes sliced off below

    grid = (b_pad // tb,)
    kernel = functools.partial(
        dqn_kernel, state_dim=state_dim, hidden=hidden, out_dim=out_dim,
        w2_row=w2_row)

    ot = pl.pallas_call(
        kernel,
        out_shape=jax.ShapeDtypeStruct((out_dim, b_pad), jnp.float32),
        grid=grid,
        in_specs=[
            pl.BlockSpec((state_dim, tb), lambda i: (0, i)),  # x^T tiled over batch lanes
            pl.BlockSpec((rows, cols), lambda i: (0, 0)),     # params: resident every step
        ],
        out_specs=pl.BlockSpec((out_dim, tb), lambda i: (0, i)),
        compiler_params=pltpu.CompilerParams(
            dimension_semantics=("parallel",)),               # megacore sharding on v7x
    )(xt, params)
    return ot[:, :B].T                                        # back to (B, out_dim)


def init_params(key, state_dim, hidden, out_dim):
    """Deterministic init mimicking torch.nn.Linear default U(-1/sqrt(fan_in), +)."""
    k1, k2, k3, k4 = jax.random.split(key, 4)
    bound1 = 1.0 / (state_dim ** 0.5)
    bound2 = 1.0 / (hidden ** 0.5)
    w1 = jax.random.uniform(k1, (state_dim, hidden), jnp.float32, -bound1, bound1)
    b1 = jax.random.uniform(k2, (1, hidden), jnp.float32, -bound1, bound1)
    w2 = jax.random.uniform(k3, (hidden, out_dim), jnp.float32, -bound2, bound2)
    b2 = jax.random.uniform(k4, (1, out_dim), jnp.float32, -bound2, bound2)
    return w1, b1, w2, b2


if __name__ == "__main__":
    # CartPole-v0: state_dim = 4 (observation), out_dim = 2 (actions).
    state_dim, hidden, out_dim = 4, 32, 2

    key = jax.random.PRNGKey(0)
    kx, kp, kx2 = jax.random.split(key, 3)
    w1, b1, w2, b2 = init_params(kp, state_dim, hidden, out_dim)

    # Parameters are packed ONCE (per optimizer update), outside the forward path.
    params = jax.block_until_ready(pack_params(w1, b1, w2, b2))

    # (1) Small acting-style batch (single grid point, batch padded to 128 lanes).
    x = jax.random.normal(kx, (8, state_dim), jnp.float32)
    out = jax.block_until_ready(dqn_forward(x, params, hidden=hidden, out_dim=out_dim))
    ref = jnp.maximum(x @ w1 + b1, 0.0) @ w2 + b2
    assert out.shape == (8, out_dim)
    assert jnp.allclose(out, ref, atol=1e-5, rtol=1e-5)

    # (2) Replay-buffer style batch: >=2 grid steps (v7x megacore) + tail padding.
    xb = jax.random.normal(kx2, (200, state_dim), jnp.float32)
    outb = jax.block_until_ready(dqn_forward(xb, params, hidden=hidden, out_dim=out_dim))
    refb = jnp.maximum(xb @ w1 + b1, 0.0) @ w2 + b2
    assert outb.shape == (200, out_dim)
    assert jnp.allclose(outb, refb, atol=1e-5, rtol=1e-5)

    # TODO(synk): replay buffer, epsilon-greedy action(), and gym env interaction
    # are host-side Python state, not part of the forward pass — not kernelized.
    # TODO(synk): a DQN train step could fuse online+target nets (stack a second
    # param section + concatenate state batches) into one pallas_call to halve
    # launch overhead; left out to keep the single-module forward semantics.
    print("KERNEL_OK")
</pallas_src>

<mosaic_0001>
module attributes {stable_mosaic.version = 11 : i64} {
  func.func @dqn_kernel(%arg0: i32, %arg1: memref<4x128xf32, #tpu.memory_space<vmem>>, %arg2: memref<40x33xf32, #tpu.memory_space<vmem>>, %arg3: memref<2x128xf32, #tpu.memory_space<vmem>>) attributes {dimension_semantics = [#tpu.dimension_semantics<parallel>], iteration_bounds = array<i64: 1>, scalar_prefetch = 0 : i64, scratch_operands = 0 : i64, tpu.core_type = #tpu.core_type<tc>, window_params = [{transform_indices = @transform_0, window_bounds = array<i64: 4, 128>}, {pipeline_mode = #tpu.pipeline_mode<synchronous>, transform_indices = @transform_1, window_bounds = array<i64: 40, 33>}, {transform_indices = @transform_2, window_bounds = array<i64: 2, 128>}]} {
    %c0 = arith.constant 0 : index
    %c0_0 = arith.constant 0 : index
    %0 = vector.load %arg1[%c0, %c0_0] : memref<4x128xf32, #tpu.memory_space<vmem>>, vector<4x128xf32>
    %c0_1 = arith.constant 0 : index
    %c0_2 = arith.constant 0 : index
    %1 = vector.load %arg2[%c0_1, %c0_2] : memref<40x33xf32, #tpu.memory_space<vmem>>, vector<40x33xf32>
    %2 = vector.extract_strided_slice %1 {offsets = [0, 0], sizes = [32, 4], strides = [1, 1]} : vector<40x33xf32> to vector<32x4xf32>
    %3 = vector.extract_strided_slice %1 {offsets = [0, 4], sizes = [32, 1], strides = [1, 1]} : vector<40x33xf32> to vector<32x1xf32>
    %4 = vector.extract_strided_slice %1 {offsets = [32, 0], sizes = [2, 32], strides = [1, 1]} : vector<40x33xf32> to vector<2x32xf32>
    %5 = vector.extract_strided_slice %1 {offsets = [32, 32], sizes = [2, 1], strides = [1, 1]} : vector<40x33xf32> to vector<2x1xf32>
    %cst = arith.constant dense<0.000000e+00> : vector<32x128xf32>
    %6 = tpu.matmul %2, %0, %cst {dimension_numbers = #tpu.dot_dimension_numbers<[1], [0], [0], [1], [0, 0, 1, 1], [], []>} : vector<32x4xf32>, vector<4x128xf32>, vector<32x128xf32> -> vector<32x128xf32>
    %7 = vector.broadcast %3 : vector<32x1xf32> to vector<32x128xf32>
    %8 = arith.addf %6, %7 : vector<32x128xf32>
    %cst_3 = arith.constant 0.000000e+00 : f32
    %9 = vector.broadcast %cst_3 : f32 to vector<32x128xf32>
    %10 = arith.maximumf %8, %9 : vector<32x128xf32>
    %cst_4 = arith.constant dense<0.000000e+00> : vector<2x128xf32>
    %11 = tpu.matmul %4, %10, %cst_4 {dimension_numbers = #tpu.dot_dimension_numbers<[1], [0], [0], [1], [0, 0, 1, 1], [], []>} : vector<2x32xf32>, vector<32x128xf32>, vector<2x128xf32> -> vector<2x128xf32>
    %12 = vector.broadcast %5 : vector<2x1xf32> to vector<2x128xf32>
    %13 = arith.addf %11, %12 : vector<2x128xf32>
    %c0_5 = arith.constant 0 : index
    %c0_6 = arith.constant 0 : index
    %14 = vector.load %arg3[%c0_5, %c0_6] : memref<2x128xf32, #tpu.memory_space<vmem>>, vector<2x128xf32>
    tpu.vector_store %arg3[%c0_5, %c0_6], %13 {strides = array<i32>} : memref<2x128xf32, #tpu.memory_space<vmem>>, vector<2x128xf32>,
    return
  }
  func.func @transform_0(%arg0: i32) -> (i32, i32) {
    %c0_i32 = arith.constant 0 : i32
    %c0_i32_0 = arith.constant 0 : i32
    return %c0_i32, %arg0 : i32, i32
  }
  func.func @transform_1(%arg0: i32) -> (i32, i32) {
    %c0_i32 = arith.constant 0 : i32
    %c0_i32_0 = arith.constant 0 : i32
    %c0_i32_1 = arith.constant 0 : i32
    return %c0_i32, %c0_i32_0 : i32, i32
  }
  func.func @transform_2(%arg0: i32) -> (i32, i32) {
    %c0_i32 = arith.constant 0 : i32
    %c0_i32_0 = arith.constant 0 : i32
    return %c0_i32, %arg0 : i32, i32
  }
}

</mosaic_0001>

<llo_original>
// kernel: dqn_forward.1
$region0: #{dqn_forward.1}
  #allocation0 [shape = 'u32[]', space=smem, size = 0x4, offset = 0x4, fixed_abs, tag = 'smem constant byte address 0x4 - core index']
  #allocation1 [shape = 'u32[144,128]{1,0:T(1,128)}', space=vmem, size = 0x12000, scoped, tag = 'internal scratch']
  %s0 = inlined_call_operand.vmem [shape: f32[4,128], index: 0, kind: input, shape index: {}]
  %s1 = inlined_call_operand.hbm [shape: f32[40,33], index: 1, kind: input, shape index: {}]
  %s2 = inlined_call_operand.vmem [shape: f32[2,128], index: 2, kind: output, shape index: {}]
  %s3 = sld [smem:[#allocation0]]
  $region22: #{dqn_forward.1} parent=0
    _
  %s5 = ssub.s32 1, %s3
  %s6 = scalar_select 0, %s5, %s3
  $region1: #{dqn_forward.1} parent=0
    #allocation2 [shape = 'u8[20480]{0}', space=vmem, size = 0x5000, scoped, tag = 'input window, operand 1, single buffered']
    #allocation3 [shape = 's32[1]{0}', space=sflag, size = 0x4, scoped, tag = 'scoped memory for dqn_forward.1']
    %7 = vsyncpa [#allocation3], 0
    // Predicated region
    $region2: #{dqn_forward.1} parent=1 // pred_check
      _
    $region3: #{dqn_forward.1} parent=1 // pred_check_branch
      %9 = sbr.rel (0) target = $region5
    $region4: #{dqn_forward.1} parent=1 // pred_region
      _
    $region5: #{dqn_forward.1} parent=1 // pred_fallthru
      _
    // Predicated region
    $region6: #{dqn_forward.1} parent=1 // pred_check
      _
    $region7: #{dqn_forward.1} parent=1 // pred_check_branch
      %11 = sbr.rel (0) target = $region9
    $region8: #{dqn_forward.1} parent=1 // pred_region
      %s13 = ssub.s32 640, 640
      %14 = vsyncadd [#allocation3], %s13
      %s15 = sshll.u32 [#allocation2], 4
      %s16 = int_to_ptr.vmem [resolvable:$true] %s15
      %21 = dma.hbm_to_vmem [thread:$0]  %s1, 640, %s16, [#allocation3], 128, 128, 8
    $region9: #{dqn_forward.1} parent=1 // pred_fallthru
      _
    // Predicated region
    $region10: #{dqn_forward.1} parent=1 // pred_check
      _
    $region11: #{dqn_forward.1} parent=1 // pred_check_branch
      %23 = sbr.rel (0) target = $region13
    $region12: #{dqn_forward.1} parent=1 // pred_region
      %24 = dma.done [#allocation3], 640
    $region13: #{dqn_forward.1} parent=1 // pred_fallthru
      _
    %v25 = vld [vmem:[%s0] sm:$0xf]
    %v26 = vld [vmem:[#allocation2] sm:$0xff]
    %v27 = vld [vmem:[#allocation2 + $0x8] sm:$0xff]
    %v28 = vld [vmem:[#allocation2 + $0x10] sm:$0xff]
    %v29 = vld [vmem:[#allocation2 + $0x18] sm:$0xff]
    %v30 = vld [vmem:[#allocation2 + $0x20] sm:$0xff]
    %32 = vset.pattern.permute.xlu0 4
    %33 = vperm.xlu0 %32, %v26
    %v34 = vpop.permute.xlu0 %33
    %37 = vset.pattern.permute.xlu0 4
    %38 = vperm.xlu0 %37, %v27
    %v39 = vpop.permute.xlu0 %38
    %42 = vset.pattern.permute.xlu0 4
    %43 = vperm.xlu0 %42, %v28
    %v44 = vpop.permute.xlu0 %43
    %47 = vset.pattern.permute.xlu0 4
    %48 = vperm.xlu0 %47, %v29
    %v49 = vpop.permute.xlu0 %48
    %vm51 = vcmask 31744
    %v52 = vsel %vm51, %v26, 0
    %v54 = vsel %vm51, %v27, 0
    %v56 = vsel %vm51, %v28, 0
    %v58 = vsel %vm51, %v29, 0
    %vm60 = vcmask 1043456
    %v62 = vsel %vm60, %v25, 0
    %64 = vmatprep.subr.mxu0 0.0
    %65 = vmatpush1.msra.mxu0 %v62
    %66 = vmatprep.subr.mxu0 0.0
    %67 = vmatpush1.msra.mxu0 0.0
    %68 = vmatprep.subr.mxu0 0.0
    %69 = vmatpush1.msra.mxu0 0.0
    %70 = vmatprep.subr.mxu0 0.0
    %71 = vmatpush1.msra.mxu0 0.0
    %72 = vmatprep.subr.mxu0 0.0
    %73 = vmatpush1.msra.mxu0 0.0
    %74 = vmatprep.subr.mxu0 0.0
    %75 = vmatpush1.msra.mxu0 0.0
    %76 = vmatprep.subr.mxu0 0.0
    %77 = vmatpush1.msra.mxu0 0.0
    %78 = vmatprep.subr.mxu0 0.0
    %79 = vmatpush1.msra.mxu0 0.0
    %80 = vmatprep.subr.mxu0 0.0
    %81 = vmatpush1.msra.mxu0 0.0
    %82 = vmatprep.subr.mxu0 0.0
    %83 = vmatpush1.msra.mxu0 0.0
    %84 = vmatprep.subr.mxu0 0.0
    %85 = vmatpush1.msra.mxu0 0.0
    %86 = vmatprep.subr.mxu0 0.0
    %87 = vmatpush1.msra.mxu0 0.0
    %88 = vmatprep.subr.mxu0 0.0
    %89 = vmatpush1.msra.mxu0 0.0
    %90 = vmatprep.subr.mxu0 0.0
    %91 = vmatpush1.msra.mxu0 0.0
    %92 = vmatprep.subr.mxu0 0.0
    %93 = vmatpush1.msra.mxu0 0.0
    %94 = vmatprep.subr.mxu0 0.0
    %95 = vmatpush1.msra.mxu0 0.0
    %96 = vmatprep.subr.mxu0 0.0
    %97 = vmatpush1.msra.mxu0 0.0
    %98 = vmatprep.subr.mxu0 0.0
    %99 = vmatpush1.msra.mxu0 0.0
    %100 = vmatprep.subr.mxu0 0.0
    %101 = vmatpush1.msra.mxu0 0.0
    %102 = vmatprep.subr.mxu0 0.0
    %103 = vmatpush1.msra.mxu0 0.0
    %104 = vmatprep.subr.mxu0 0.0
    %105 = vmatpush1.msra.mxu0 0.0
    %106 = vmatprep.subr.mxu0 0.0
    %107 = vmatpush1.msra.mxu0 0.0
    %108 = vmatprep.subr.mxu0 0.0
    %109 = vmatpush1.msra.mxu0 0.0
    %110 = vmatprep.subr.mxu0 0.0
    %111 = vmatpush1.msra.mxu0 0.0
    %112 = vmatprep.subr.mxu0 0.0
    %113 = vmatpush1.msra.mxu0 0.0
    %114 = vmatprep.subr.mxu0 0.0
    %115 = vmatpush1.msra.mxu0 0.0
    %116 = vmatprep.subr.mxu0 0.0
    %117 = vmatpush1.msra.mxu0 0.0
    %118 = vmatprep.subr.mxu0 0.0
    %119 = vmatpush1.msra.mxu0 0.0
    %120 = vmatprep.subr.mxu0 0.0
    %121 = vmatpush1.msra.mxu0 0.0
    %122 = vmatprep.subr.mxu0 0.0
    %123 = vmatpush1.msra.mxu0 0.0
    %124 = vmatprep.subr.mxu0 0.0
    %125 = vmatpush1.msra.mxu0 0.0
    %126 = vmatprep.subr.mxu0 0.0
    %127 = vmatpush1.msra.mxu0 0.0
    %128 = vmatprep.mubr.f32.mxu0 0.0
    %129 = vmatmul.mubr.f32.gmra.mrb[0].mxu0 %v52
    %v130 = vpop.f32.mrb[0].mxu0
    %v131 = vadd.f32 %v34, %v130
    %v132 = vpop.f32.mrb[0].mxu0
    %133 = vmatprep.mubr.f32.mxu0 0.0
    %134 = vmatmul.mubr.f32.gmra.mrb[0].mxu0 %v54
    %v135 = vpop.f32.mrb[0].mxu0
    %v136 = vadd.f32 %v39, %v135
    %v137 = vpop.f32.mrb[0].mxu0
    %138 = vmatprep.mubr.f32.mxu0 0.0
    %139 = vmatmul.mubr.f32.gmra.mrb[0].mxu0 %v56
    %v140 = vpop.f32.mrb[0].mxu0
    %v141 = vadd.f32 %v44, %v140
    %v142 = vpop.f32.mrb[0].mxu0
    %143 = vmatprep.mubr.f32.mxu0 0.0
    %144 = vmatmul.mubr.f32.gmra.mrb[0].mxu0 %v58
    %v145 = vpop.f32.mrb[0].mxu0
    %v146 = vadd.f32 %v49, %v145
    %v147 = vpop.f32.mrb[0].mxu0
    %148 = vdwg.mxu0
    %v149 = vmax.f32 %v131, 0.0
    %v150 = vmax.f32 %v136, 0.0
    %v151 = vmax.f32 %v141, 0.0
    %v152 = vmax.f32 %v146, 0.0
    %154 = vset.pattern.permute.xlu0 32
    %155 = vperm.xlu0 %154, %v30
    %v156 = vpop.permute.xlu0 %155
    %vm158 = vcmask 261120
    %v159 = vsel %vm158, %v30, 0
    %161 = vmatprep.subr.mxu0 0.0
    %162 = vmatpush1.msra.mxu0 %v149
    %163 = vmatprep.subr.mxu0 0.0
    %164 = vmatpush1.msra.mxu0 %v150
    %165 = vmatprep.subr.mxu0 0.0
    %166 = vmatpush1.msra.mxu0 %v151
    %167 = vmatprep.subr.mxu0 0.0
    %168 = vmatpush1.msra.mxu0 %v152
    %169 = vmatprep.subr.mxu0 0.0
    %170 = vmatpush1.msra.mxu0 0.0
    %171 = vmatprep.subr.mxu0 0.0
    %172 = vmatpush1.msra.mxu0 0.0
    %173 = vmatprep.subr.mxu0 0.0
    %174 = vmatpush1.msra.mxu0 0.0
    %175 = vmatprep.subr.mxu0 0.0
    %176 = vmatpush1.msra.mxu0 0.0
    %177 = vmatprep.subr.mxu0 0.0
    %178 = vmatpush1.msra.mxu0 0.0
    %179 = vmatprep.subr.mxu0 0.0
    %180 = vmatpush1.msra.mxu0 0.0
    %181 = vmatprep.subr.mxu0 0.0
    %182 = vmatpush1.msra.mxu0 0.0
    %183 = vmatprep.subr.mxu0 0.0
    %184 = vmatpush1.msra.mxu0 0.0
    %185 = vmatprep.subr.mxu0 0.0
    %186 = vmatpush1.msra.mxu0 0.0
    %187 = vmatprep.subr.mxu0 0.0
    %188 = vmatpush1.msra.mxu0 0.0
    %189 = vmatprep.subr.mxu0 0.0
    %190 = vmatpush1.msra.mxu0 0.0
    %191 = vmatprep.subr.mxu0 0.0
    %192 = vmatpush1.msra.mxu0 0.0
    %193 = vmatprep.subr.mxu0 0.0
    %194 = vmatpush1.msra.mxu0 0.0
    %195 = vmatprep.subr.mxu0 0.0
    %196 = vmatpush1.msra.mxu0 0.0
    %197 = vmatprep.subr.mxu0 0.0
    %198 = vmatpush1.msra.mxu0 0.0
    %199 = vmatprep.subr.mxu0 0.0
    %200 = vmatpush1.msra.mxu0 0.0
    %201 = vmatprep.subr.mxu0 0.0
    %202 = vmatpush1.msra.mxu0 0.0
    %203 = vmatprep.subr.mxu0 0.0
    %204 = vmatpush1.msra.mxu0 0.0
    %205 = vmatprep.subr.mxu0 0.0
    %206 = vmatpush1.msra.mxu0 0.0
    %207 = vmatprep.subr.mxu0 0.0
    %208 = vmatpush1.msra.mxu0 0.0
    %209 = vmatprep.subr.mxu0 0.0
    %210 = vmatpush1.msra.mxu0 0.0
    %211 = vmatprep.subr.mxu0 0.0
    %212 = vmatpush1.msra.mxu0 0.0
    %213 = vmatprep.subr.mxu0 0.0
    %214 = vmatpush1.msra.mxu0 0.0
    %215 = vmatprep.subr.mxu0 0.0
    %216 = vmatpush1.msra.mxu0 0.0
    %217 = vmatprep.subr.mxu0 0.0
    %218 = vmatpush1.msra.mxu0 0.0
    %219 = vmatprep.subr.mxu0 0.0
    %220 = vmatpush1.msra.mxu0 0.0
    %221 = vmatprep.subr.mxu0 0.0
    %222 = vmatpush1.msra.mxu0 0.0
    %223 = vmatprep.subr.mxu0 0.0
    %224 = vmatpush1.msra.mxu0 0.0
    %225 = vmatprep.mubr.f32.mxu0 0.0
    %226 = vmatmul.mubr.f32.gmra.mrb[0].mxu0 %v159
    %v227 = vpop.f32.mrb[0].mxu0
    %v228 = vadd.f32 %v156, %v227
    %v229 = vpop.f32.mrb[0].mxu0
    %230 = vdwg.mxu0
    %231 = vst [vmem:[%s2] sm:$0x3] %v228
    // Predicated region
    $region14: #{dqn_forward.1} parent=1 // pred_check
      _
    $region15: #{dqn_forward.1} parent=1 // pred_check_branch
      %233 = sbr.rel (0) target = $region17
    $region16: #{dqn_forward.1} parent=1 // pred_region
      _
    $region17: #{dqn_forward.1} parent=1 // pred_fallthru
      _
    // Predicated region
    $region18: #{dqn_forward.1} parent=1 // pred_check
      _
    $region19: #{dqn_forward.1} parent=1 // pred_check_branch
      %235 = sbr.rel (0) target = $region21
    $region20: #{dqn_forward.1} parent=1 // pred_region
      _
    $region21: #{dqn_forward.1} parent=1 // pred_fallthru
      _
    %236 = vsyncpa [#allocation3], 1

</llo_original>
